<compile_context>
chip_gen: v7x
topology: tpu7x:2x2x1
jax: 0.10.0
libtpu: 0.0.40
codegen_flags: <defaults>
</compile_context>

<pallas_src>
import jax
import jax.numpy as jnp
from jax.experimental import pallas as pl
from jax.experimental.pallas import tpu as pltpu

LAYER_DIMS = (5, 4, 3, 1)   # fc1..fc4 output widths (matches the PyTorch Model)
LANES = 128
SUBLANES = 8


def _param_offsets(input_features):
    """Flat offsets of each layer's (W, b) inside the packed 1-D parameter slab."""
    dims = (input_features,) + LAYER_DIMS
    offsets = []
    off = 0
    for l in range(len(LAYER_DIMS)):
        fan_in, fan_out = dims[l], dims[l + 1]
        w_off = off
        b_off = off + fan_in * fan_out
        offsets.append((w_off, b_off, fan_in, fan_out))
        off = b_off + fan_out
    return offsets, off


def _make_kernel(input_features):
    offsets, _ = _param_offsets(input_features)
    n_layers = len(offsets)

    def kernel(theta_ref, x_ref, o_ref):
        # theta_ref: SMEM f32[P]            packed W1,b1,...,W4,b4 (PyTorch (out,in) order)
        # x_ref:     VMEM f32[F, S, 128]    batch on (sublane, lane); features on leading dim
        # o_ref:     VMEM f32[S, 128]       dense output slab
        rows = [x_ref[k] for k in range(input_features)]   # each (S, 128): fully packed vregs
        for li, (w_off, b_off, fan_in, fan_out) in enumerate(offsets):
            new_rows = []
            for j in range(fan_out):
                # z_j = sum_k W[j,k] * h_k + b_j   (unrolled VPU mul-adds;
                # scalar weights read from SMEM and broadcast across the vreg)
                acc = rows[0] * theta_ref[w_off + j * fan_in]
                for k in range(1, fan_in):
                    acc = acc + rows[k] * theta_ref[w_off + j * fan_in + k]
                acc = acc + theta_ref[b_off + j]
                if li < n_layers - 1:
                    new_rows.append(jnp.tanh(acc))
                else:
                    new_rows.append(jax.nn.sigmoid(acc))
            rows = new_rows
        o_ref[...] = rows[0]

    return kernel


def pack_params(params):
    """Flatten PyTorch-style (out,in) weights and (out,) biases into one f32 slab."""
    pieces = []
    for l in range(1, len(LAYER_DIMS) + 1):
        pieces.append(params[f"w{l}"].reshape(-1))
        pieces.append(params[f"b{l}"].reshape(-1))
    return jnp.concatenate(pieces).astype(jnp.float32)


def mlp_forward(x, params, *, batch_tile=2048):
    """x: (B, F) float32.  params: dict of w1..w4 (out,in) and b1..b4 (out,)."""
    B, F = x.shape
    lane_block = SUBLANES * LANES                      # 1024 rows = one fully packed vreg
    batch_tile = max(lane_block, (batch_tile // lane_block) * lane_block)
    # Shrink the tile when the (padded) batch is smaller than one tile.
    b_min = ((B + lane_block - 1) // lane_block) * lane_block
    batch_tile = min(batch_tile, b_min)
    B_pad = ((B + batch_tile - 1) // batch_tile) * batch_tile

    theta = pack_params(params)
    P = theta.shape[0]

    # Layout plumbing (wrapper-side, not in the kernel): batch -> (sublane, lane).
    x_pad = jnp.zeros((B_pad, F), jnp.float32).at[:B].set(x.astype(jnp.float32))
    x_packed = x_pad.T.reshape(F, B_pad // LANES, LANES)      # (F, rows, 128)

    rows_per_tile = batch_tile // LANES
    grid = (B_pad // batch_tile,)

    out_packed = pl.pallas_call(
        _make_kernel(F),
        out_shape=jax.ShapeDtypeStruct((B_pad // LANES, LANES), jnp.float32),
        grid_spec=pltpu.PrefetchScalarGridSpec(
            num_scalar_prefetch=0,
            grid=grid,
            in_specs=[
                # One tiny packed parameter slab in SMEM (scalar-indexed reads).
                pl.BlockSpec((P,), lambda i: (0,),
                             memory_space=pltpu.MemorySpace.SMEM),
                # x tile: (F, rows_per_tile, 128) — lane/sublane-dense.
                pl.BlockSpec((F, rows_per_tile, LANES), lambda i: (0, i, 0)),
            ],
            # Lane-dense output slab: unmasked full-width stores + dense writeback.
            out_specs=pl.BlockSpec((rows_per_tile, LANES), lambda i: (i, 0)),
        ),
        compiler_params=pltpu.CompilerParams(
            dimension_semantics=("parallel",),       # shard grid steps across TCs (v7x)
            vmem_limit_bytes=32 * 1024 * 1024,       # explicit, generation-portable headroom
        ),
    )(theta, x_packed)

    return out_packed.reshape(B_pad)[:B].reshape(B, 1)


def init_params(key, input_features):
    """Deterministic init mimicking nn.Linear's U(-1/sqrt(fan_in), 1/sqrt(fan_in))."""
    dims = (input_features,) + LAYER_DIMS
    params = {}
    for idx in range(1, len(LAYER_DIMS) + 1):
        fan_in, fan_out = dims[idx - 1], dims[idx]
        key, kw, kb = jax.random.split(key, 3)
        bound = 1.0 / jnp.sqrt(jnp.float32(fan_in))
        params[f"w{idx}"] = jax.random.uniform(
            kw, (fan_out, fan_in), jnp.float32, -bound, bound)   # PyTorch (out, in)
        params[f"b{idx}"] = jax.random.uniform(
            kb, (fan_out,), jnp.float32, -bound, bound)
    return params


def reference_forward(x, params):
    h = jnp.tanh(x @ params["w1"].T + params["b1"])
    h = jnp.tanh(h @ params["w2"].T + params["b2"])
    h = jnp.tanh(h @ params["w3"].T + params["b3"])
    return jax.nn.sigmoid(h @ params["w4"].T + params["b4"])


if __name__ == "__main__":
    key = jax.random.PRNGKey(0)
    key, kx = jax.random.split(key)

    batch = 16
    input_features = 8   # diabetes dataset has 8 features

    x = jax.random.normal(kx, (batch, input_features), jnp.float32)
    params = init_params(key, input_features)

    out = mlp_forward(x, params)
    out = jax.block_until_ready(out)

    ref = reference_forward(x, params)
    assert out.shape == (batch, 1)
    assert jnp.allclose(out, ref, atol=1e-5, rtol=1e-5), "mismatch vs JAX reference"

    print("KERNEL_OK")
</pallas_src>

<mosaic_0001>
module attributes {stable_mosaic.version = 11 : i64} {
  func.func @kernel(%arg0: i32, %arg1: memref<88xf32, #tpu.memory_space<smem>>, %arg2: memref<8x8x128xf32, #tpu.memory_space<vmem>>, %arg3: memref<8x128xf32, #tpu.memory_space<vmem>>) attributes {dimension_semantics = [#tpu.dimension_semantics<parallel>], iteration_bounds = array<i64: 1>, scalar_prefetch = 0 : i64, scratch_operands = 0 : i64, tpu.core_type = #tpu.core_type<tc>, window_params = [{transform_indices = @transform_0, window_bounds = array<i64: 88>}, {transform_indices = @transform_1, window_bounds = array<i64: 8, 8, 128>}, {transform_indices = @transform_2, window_bounds = array<i64: 8, 128>}]} {
    %c0 = arith.constant 0 : index
    %c0_0 = arith.constant 0 : index
    %c0_1 = arith.constant 0 : index
    %0 = vector.load %arg2[%c0, %c0_0, %c0_1] : memref<8x8x128xf32, #tpu.memory_space<vmem>>, vector<1x8x128xf32>
    %1 = vector.shape_cast %0 : vector<1x8x128xf32> to vector<8x128xf32>
    %c1 = arith.constant 1 : index
    %c0_2 = arith.constant 0 : index
    %c0_3 = arith.constant 0 : index
    %2 = vector.load %arg2[%c1, %c0_2, %c0_3] : memref<8x8x128xf32, #tpu.memory_space<vmem>>, vector<1x8x128xf32>
    %3 = vector.shape_cast %2 : vector<1x8x128xf32> to vector<8x128xf32>
    %c2 = arith.constant 2 : index
    %c0_4 = arith.constant 0 : index
    %c0_5 = arith.constant 0 : index
    %4 = vector.load %arg2[%c2, %c0_4, %c0_5] : memref<8x8x128xf32, #tpu.memory_space<vmem>>, vector<1x8x128xf32>
    %5 = vector.shape_cast %4 : vector<1x8x128xf32> to vector<8x128xf32>
    %c3 = arith.constant 3 : index
    %c0_6 = arith.constant 0 : index
    %c0_7 = arith.constant 0 : index
    %6 = vector.load %arg2[%c3, %c0_6, %c0_7] : memref<8x8x128xf32, #tpu.memory_space<vmem>>, vector<1x8x128xf32>
    %7 = vector.shape_cast %6 : vector<1x8x128xf32> to vector<8x128xf32>
    %c4 = arith.constant 4 : index
    %c0_8 = arith.constant 0 : index
    %c0_9 = arith.constant 0 : index
    %8 = vector.load %arg2[%c4, %c0_8, %c0_9] : memref<8x8x128xf32, #tpu.memory_space<vmem>>, vector<1x8x128xf32>
    %9 = vector.shape_cast %8 : vector<1x8x128xf32> to vector<8x128xf32>
    %c5 = arith.constant 5 : index
    %c0_10 = arith.constant 0 : index
    %c0_11 = arith.constant 0 : index
    %10 = vector.load %arg2[%c5, %c0_10, %c0_11] : memref<8x8x128xf32, #tpu.memory_space<vmem>>, vector<1x8x128xf32>
    %11 = vector.shape_cast %10 : vector<1x8x128xf32> to vector<8x128xf32>
    %c6 = arith.constant 6 : index
    %c0_12 = arith.constant 0 : index
    %c0_13 = arith.constant 0 : index
    %12 = vector.load %arg2[%c6, %c0_12, %c0_13] : memref<8x8x128xf32, #tpu.memory_space<vmem>>, vector<1x8x128xf32>
    %13 = vector.shape_cast %12 : vector<1x8x128xf32> to vector<8x128xf32>
    %c7 = arith.constant 7 : index
    %c0_14 = arith.constant 0 : index
    %c0_15 = arith.constant 0 : index
    %14 = vector.load %arg2[%c7, %c0_14, %c0_15] : memref<8x8x128xf32, #tpu.memory_space<vmem>>, vector<1x8x128xf32>
    %15 = vector.shape_cast %14 : vector<1x8x128xf32> to vector<8x128xf32>
    %c0_16 = arith.constant 0 : index
    %16 = memref.load %arg1[%c0_16] : memref<88xf32, #tpu.memory_space<smem>>
    %17 = vector.broadcast %16 : f32 to vector<8x128xf32>
    %18 = arith.mulf %1, %17 : vector<8x128xf32>
    %c1_17 = arith.constant 1 : index
    %19 = memref.load %arg1[%c1_17] : memref<88xf32, #tpu.memory_space<smem>>
    %20 = vector.broadcast %19 : f32 to vector<8x128xf32>
    %21 = arith.mulf %3, %20 : vector<8x128xf32>
    %22 = arith.addf %18, %21 : vector<8x128xf32>
    %c2_18 = arith.constant 2 : index
    %23 = memref.load %arg1[%c2_18] : memref<88xf32, #tpu.memory_space<smem>>
    %24 = vector.broadcast %23 : f32 to vector<8x128xf32>
    %25 = arith.mulf %5, %24 : vector<8x128xf32>
    %26 = arith.addf %22, %25 : vector<8x128xf32>
    %c3_19 = arith.constant 3 : index
    %27 = memref.load %arg1[%c3_19] : memref<88xf32, #tpu.memory_space<smem>>
    %28 = vector.broadcast %27 : f32 to vector<8x128xf32>
    %29 = arith.mulf %7, %28 : vector<8x128xf32>
    %30 = arith.addf %26, %29 : vector<8x128xf32>
    %c4_20 = arith.constant 4 : index
    %31 = memref.load %arg1[%c4_20] : memref<88xf32, #tpu.memory_space<smem>>
    %32 = vector.broadcast %31 : f32 to vector<8x128xf32>
    %33 = arith.mulf %9, %32 : vector<8x128xf32>
    %34 = arith.addf %30, %33 : vector<8x128xf32>
    %c5_21 = arith.constant 5 : index
    %35 = memref.load %arg1[%c5_21] : memref<88xf32, #tpu.memory_space<smem>>
    %36 = vector.broadcast %35 : f32 to vector<8x128xf32>
    %37 = arith.mulf %11, %36 : vector<8x128xf32>
    %38 = arith.addf %34, %37 : vector<8x128xf32>
    %c6_22 = arith.constant 6 : index
    %39 = memref.load %arg1[%c6_22] : memref<88xf32, #tpu.memory_space<smem>>
    %40 = vector.broadcast %39 : f32 to vector<8x128xf32>
    %41 = arith.mulf %13, %40 : vector<8x128xf32>
    %42 = arith.addf %38, %41 : vector<8x128xf32>
    %c7_23 = arith.constant 7 : index
    %43 = memref.load %arg1[%c7_23] : memref<88xf32, #tpu.memory_space<smem>>
    %44 = vector.broadcast %43 : f32 to vector<8x128xf32>
    %45 = arith.mulf %15, %44 : vector<8x128xf32>
    %46 = arith.addf %42, %45 : vector<8x128xf32>
    %c40 = arith.constant 40 : index
    %47 = memref.load %arg1[%c40] : memref<88xf32, #tpu.memory_space<smem>>
    %48 = vector.broadcast %47 : f32 to vector<8x128xf32>
    %49 = arith.addf %46, %48 : vector<8x128xf32>
    %50 = math.tanh %49 : vector<8x128xf32>
    %c8 = arith.constant 8 : index
    %51 = memref.load %arg1[%c8] : memref<88xf32, #tpu.memory_space<smem>>
    %52 = vector.broadcast %51 : f32 to vector<8x128xf32>
    %53 = arith.mulf %1, %52 : vector<8x128xf32>
    %c9 = arith.constant 9 : index
    %54 = memref.load %arg1[%c9] : memref<88xf32, #tpu.memory_space<smem>>
    %55 = vector.broadcast %54 : f32 to vector<8x128xf32>
    %56 = arith.mulf %3, %55 : vector<8x128xf32>
    %57 = arith.addf %53, %56 : vector<8x128xf32>
    %c10 = arith.constant 10 : index
    %58 = memref.load %arg1[%c10] : memref<88xf32, #tpu.memory_space<smem>>
    %59 = vector.broadcast %58 : f32 to vector<8x128xf32>
    %60 = arith.mulf %5, %59 : vector<8x128xf32>
    %61 = arith.addf %57, %60 : vector<8x128xf32>
    %c11 = arith.constant 11 : index
    %62 = memref.load %arg1[%c11] : memref<88xf32, #tpu.memory_space<smem>>
    %63 = vector.broadcast %62 : f32 to vector<8x128xf32>
    %64 = arith.mulf %7, %63 : vector<8x128xf32>
    %65 = arith.addf %61, %64 : vector<8x128xf32>
    %c12 = arith.constant 12 : index
    %66 = memref.load %arg1[%c12] : memref<88xf32, #tpu.memory_space<smem>>
    %67 = vector.broadcast %66 : f32 to vector<8x128xf32>
    %68 = arith.mulf %9, %67 : vector<8x128xf32>
    %69 = arith.addf %65, %68 : vector<8x128xf32>
    %c13 = arith.constant 13 : index
    %70 = memref.load %arg1[%c13] : memref<88xf32, #tpu.memory_space<smem>>
    %71 = vector.broadcast %70 : f32 to vector<8x128xf32>
    %72 = arith.mulf %11, %71 : vector<8x128xf32>
    %73 = arith.addf %69, %72 : vector<8x128xf32>
    %c14 = arith.constant 14 : index
    %74 = memref.load %arg1[%c14] : memref<88xf32, #tpu.memory_space<smem>>
    %75 = vector.broadcast %74 : f32 to vector<8x128xf32>
    %76 = arith.mulf %13, %75 : vector<8x128xf32>
    %77 = arith.addf %73, %76 : vector<8x128xf32>
    %c15 = arith.constant 15 : index
    %78 = memref.load %arg1[%c15] : memref<88xf32, #tpu.memory_space<smem>>
    %79 = vector.broadcast %78 : f32 to vector<8x128xf32>
    %80 = arith.mulf %15, %79 : vector<8x128xf32>
    %81 = arith.addf %77, %80 : vector<8x128xf32>
    %c41 = arith.constant 41 : index
    %82 = memref.load %arg1[%c41] : memref<88xf32, #tpu.memory_space<smem>>
    %83 = vector.broadcast %82 : f32 to vector<8x128xf32>
    %84 = arith.addf %81, %83 : vector<8x128xf32>
    %85 = math.tanh %84 : vector<8x128xf32>
    %c16 = arith.constant 16 : index
    %86 = memref.load %arg1[%c16] : memref<88xf32, #tpu.memory_space<smem>>
    %87 = vector.broadcast %86 : f32 to vector<8x128xf32>
    %88 = arith.mulf %1, %87 : vector<8x128xf32>
    %c17 = arith.constant 17 : index
    %89 = memref.load %arg1[%c17] : memref<88xf32, #tpu.memory_space<smem>>
    %90 = vector.broadcast %89 : f32 to vector<8x128xf32>
    %91 = arith.mulf %3, %90 : vector<8x128xf32>
    %92 = arith.addf %88, %91 : vector<8x128xf32>
    %c18 = arith.constant 18 : index
    %93 = memref.load %arg1[%c18] : memref<88xf32, #tpu.memory_space<smem>>
    %94 = vector.broadcast %93 : f32 to vector<8x128xf32>
    %95 = arith.mulf %5, %94 : vector<8x128xf32>
    %96 = arith.addf %92, %95 : vector<8x128xf32>
    %c19 = arith.constant 19 : index
    %97 = memref.load %arg1[%c19] : memref<88xf32, #tpu.memory_space<smem>>
    %98 = vector.broadcast %97 : f32 to vector<8x128xf32>
    %99 = arith.mulf %7, %98 : vector<8x128xf32>
    %100 = arith.addf %96, %99 : vector<8x128xf32>
    %c20 = arith.constant 20 : index
    %101 = memref.load %arg1[%c20] : memref<88xf32, #tpu.memory_space<smem>>
    %102 = vector.broadcast %101 : f32 to vector<8x128xf32>
    %103 = arith.mulf %9, %102 : vector<8x128xf32>
    %104 = arith.addf %100, %103 : vector<8x128xf32>
    %c21 = arith.constant 21 : index
    %105 = memref.load %arg1[%c21] : memref<88xf32, #tpu.memory_space<smem>>
    %106 = vector.broadcast %105 : f32 to vector<8x128xf32>
    %107 = arith.mulf %11, %106 : vector<8x128xf32>
    %108 = arith.addf %104, %107 : vector<8x128xf32>
    %c22 = arith.constant 22 : index
    %109 = memref.load %arg1[%c22] : memref<88xf32, #tpu.memory_space<smem>>
    %110 = vector.broadcast %109 : f32 to vector<8x128xf32>
    %111 = arith.mulf %13, %110 : vector<8x128xf32>
    %112 = arith.addf %108, %111 : vector<8x128xf32>
    %c23 = arith.constant 23 : index
    %113 = memref.load %arg1[%c23] : memref<88xf32, #tpu.memory_space<smem>>
    %114 = vector.broadcast %113 : f32 to vector<8x128xf32>
    %115 = arith.mulf %15, %114 : vector<8x128xf32>
    %116 = arith.addf %112, %115 : vector<8x128xf32>
    %c42 = arith.constant 42 : index
    %117 = memref.load %arg1[%c42] : memref<88xf32, #tpu.memory_space<smem>>
    %118 = vector.broadcast %117 : f32 to vector<8x128xf32>
    %119 = arith.addf %116, %118 : vector<8x128xf32>
    %120 = math.tanh %119 : vector<8x128xf32>
    %c24 = arith.constant 24 : index
    %121 = memref.load %arg1[%c24] : memref<88xf32, #tpu.memory_space<smem>>
    %122 = vector.broadcast %121 : f32 to vector<8x128xf32>
    %123 = arith.mulf %1, %122 : vector<8x128xf32>
    %c25 = arith.constant 25 : index
    %124 = memref.load %arg1[%c25] : memref<88xf32, #tpu.memory_space<smem>>
    %125 = vector.broadcast %124 : f32 to vector<8x128xf32>
    %126 = arith.mulf %3, %125 : vector<8x128xf32>
    %127 = arith.addf %123, %126 : vector<8x128xf32>
    %c26 = arith.constant 26 : index
    %128 = memref.load %arg1[%c26] : memref<88xf32, #tpu.memory_space<smem>>
    %129 = vector.broadcast %128 : f32 to vector<8x128xf32>
    %130 = arith.mulf %5, %129 : vector<8x128xf32>
    %131 = arith.addf %127, %130 : vector<8x128xf32>
    %c27 = arith.constant 27 : index
    %132 = memref.load %arg1[%c27] : memref<88xf32, #tpu.memory_space<smem>>
    %133 = vector.broadcast %132 : f32 to vector<8x128xf32>
    %134 = arith.mulf %7, %133 : vector<8x128xf32>
    %135 = arith.addf %131, %134 : vector<8x128xf32>
    %c28 = arith.constant 28 : index
    %136 = memref.load %arg1[%c28] : memref<88xf32, #tpu.memory_space<smem>>
    %137 = vector.broadcast %136 : f32 to vector<8x128xf32>
    %138 = arith.mulf %9, %137 : vector<8x128xf32>
    %139 = arith.addf %135, %138 : vector<8x128xf32>
    %c29 = arith.constant 29 : index
    %140 = memref.load %arg1[%c29] : memref<88xf32, #tpu.memory_space<smem>>
    %141 = vector.broadcast %140 : f32 to vector<8x128xf32>
    %142 = arith.mulf %11, %141 : vector<8x128xf32>
    %143 = arith.addf %139, %142 : vector<8x128xf32>
    %c30 = arith.constant 30 : index
    %144 = memref.load %arg1[%c30] : memref<88xf32, #tpu.memory_space<smem>>
    %145 = vector.broadcast %144 : f32 to vector<8x128xf32>
    %146 = arith.mulf %13, %145 : vector<8x128xf32>
    %147 = arith.addf %143, %146 : vector<8x128xf32>
    %c31 = arith.constant 31 : index
    %148 = memref.load %arg1[%c31] : memref<88xf32, #tpu.memory_space<smem>>
    %149 = vector.broadcast %148 : f32 to vector<8x128xf32>
    %150 = arith.mulf %15, %149 : vector<8x128xf32>
    %151 = arith.addf %147, %150 : vector<8x128xf32>
    %c43 = arith.constant 43 : index
    %152 = memref.load %arg1[%c43] : memref<88xf32, #tpu.memory_space<smem>>
    %153 = vector.broadcast %152 : f32 to vector<8x128xf32>
    %154 = arith.addf %151, %153 : vector<8x128xf32>
    %155 = math.tanh %154 : vector<8x128xf32>
    %c32 = arith.constant 32 : index
    %156 = memref.load %arg1[%c32] : memref<88xf32, #tpu.memory_space<smem>>
    %157 = vector.broadcast %156 : f32 to vector<8x128xf32>
    %158 = arith.mulf %1, %157 : vector<8x128xf32>
    %c33 = arith.constant 33 : index
    %159 = memref.load %arg1[%c33] : memref<88xf32, #tpu.memory_space<smem>>
    %160 = vector.broadcast %159 : f32 to vector<8x128xf32>
    %161 = arith.mulf %3, %160 : vector<8x128xf32>
    %162 = arith.addf %158, %161 : vector<8x128xf32>
    %c34 = arith.constant 34 : index
    %163 = memref.load %arg1[%c34] : memref<88xf32, #tpu.memory_space<smem>>
    %164 = vector.broadcast %163 : f32 to vector<8x128xf32>
    %165 = arith.mulf %5, %164 : vector<8x128xf32>
    %166 = arith.addf %162, %165 : vector<8x128xf32>
    %c35 = arith.constant 35 : index
    %167 = memref.load %arg1[%c35] : memref<88xf32, #tpu.memory_space<smem>>
    %168 = vector.broadcast %167 : f32 to vector<8x128xf32>
    %169 = arith.mulf %7, %168 : vector<8x128xf32>
    %170 = arith.addf %166, %169 : vector<8x128xf32>
    %c36 = arith.constant 36 : index
    %171 = memref.load %arg1[%c36] : memref<88xf32, #tpu.memory_space<smem>>
    %172 = vector.broadcast %171 : f32 to vector<8x128xf32>
    %173 = arith.mulf %9, %172 : vector<8x128xf32>
    %174 = arith.addf %170, %173 : vector<8x128xf32>
    %c37 = arith.constant 37 : index
    %175 = memref.load %arg1[%c37] : memref<88xf32, #tpu.memory_space<smem>>
    %176 = vector.broadcast %175 : f32 to vector<8x128xf32>
    %177 = arith.mulf %11, %176 : vector<8x128xf32>
    %178 = arith.addf %174, %177 : vector<8x128xf32>
    %c38 = arith.constant 38 : index
    %179 = memref.load %arg1[%c38] : memref<88xf32, #tpu.memory_space<smem>>
    %180 = vector.broadcast %179 : f32 to vector<8x128xf32>
    %181 = arith.mulf %13, %180 : vector<8x128xf32>
    %182 = arith.addf %178, %181 : vector<8x128xf32>
    %c39 = arith.constant 39 : index
    %183 = memref.load %arg1[%c39] : memref<88xf32, #tpu.memory_space<smem>>
    %184 = vector.broadcast %183 : f32 to vector<8x128xf32>
    %185 = arith.mulf %15, %184 : vector<8x128xf32>
    %186 = arith.addf %182, %185 : vector<8x128xf32>
    %c44 = arith.constant 44 : index
    %187 = memref.load %arg1[%c44] : memref<88xf32, #tpu.memory_space<smem>>
    %188 = vector.broadcast %187 : f32 to vector<8x128xf32>
    %189 = arith.addf %186, %188 : vector<8x128xf32>
    %190 = math.tanh %189 : vector<8x128xf32>
    %c45 = arith.constant 45 : index
    %191 = memref.load %arg1[%c45] : memref<88xf32, #tpu.memory_space<smem>>
    %192 = vector.broadcast %191 : f32 to vector<8x128xf32>
    %193 = arith.mulf %50, %192 : vector<8x128xf32>
    %c46 = arith.constant 46 : index
    %194 = memref.load %arg1[%c46] : memref<88xf32, #tpu.memory_space<smem>>
    %195 = vector.broadcast %194 : f32 to vector<8x128xf32>
    %196 = arith.mulf %85, %195 : vector<8x128xf32>
    %197 = arith.addf %193, %196 : vector<8x128xf32>
    %c47 = arith.constant 47 : index
    %198 = memref.load %arg1[%c47] : memref<88xf32, #tpu.memory_space<smem>>
    %199 = vector.broadcast %198 : f32 to vector<8x128xf32>
    %200 = arith.mulf %120, %199 : vector<8x128xf32>
    %201 = arith.addf %197, %200 : vector<8x128xf32>
    %c48 = arith.constant 48 : index
    %202 = memref.load %arg1[%c48] : memref<88xf32, #tpu.memory_space<smem>>
    %203 = vector.broadcast %202 : f32 to vector<8x128xf32>
    %204 = arith.mulf %155, %203 : vector<8x128xf32>
    %205 = arith.addf %201, %204 : vector<8x128xf32>
    %c49 = arith.constant 49 : index
    %206 = memref.load %arg1[%c49] : memref<88xf32, #tpu.memory_space<smem>>
    %207 = vector.broadcast %206 : f32 to vector<8x128xf32>
    %208 = arith.mulf %190, %207 : vector<8x128xf32>
    %209 = arith.addf %205, %208 : vector<8x128xf32>
    %c65 = arith.constant 65 : index
    %210 = memref.load %arg1[%c65] : memref<88xf32, #tpu.memory_space<smem>>
    %211 = vector.broadcast %210 : f32 to vector<8x128xf32>
    %212 = arith.addf %209, %211 : vector<8x128xf32>
    %213 = math.tanh %212 : vector<8x128xf32>
    %c50 = arith.constant 50 : index
    %214 = memref.load %arg1[%c50] : memref<88xf32, #tpu.memory_space<smem>>
    %215 = vector.broadcast %214 : f32 to vector<8x128xf32>
    %216 = arith.mulf %50, %215 : vector<8x128xf32>
    %c51 = arith.constant 51 : index
    %217 = memref.load %arg1[%c51] : memref<88xf32, #tpu.memory_space<smem>>
    %218 = vector.broadcast %217 : f32 to vector<8x128xf32>
    %219 = arith.mulf %85, %218 : vector<8x128xf32>
    %220 = arith.addf %216, %219 : vector<8x128xf32>
    %c52 = arith.constant 52 : index
    %221 = memref.load %arg1[%c52] : memref<88xf32, #tpu.memory_space<smem>>
    %222 = vector.broadcast %221 : f32 to vector<8x128xf32>
    %223 = arith.mulf %120, %222 : vector<8x128xf32>
    %224 = arith.addf %220, %223 : vector<8x128xf32>
    %c53 = arith.constant 53 : index
    %225 = memref.load %arg1[%c53] : memref<88xf32, #tpu.memory_space<smem>>
    %226 = vector.broadcast %225 : f32 to vector<8x128xf32>
    %227 = arith.mulf %155, %226 : vector<8x128xf32>
    %228 = arith.addf %224, %227 : vector<8x128xf32>
    %c54 = arith.constant 54 : index
    %229 = memref.load %arg1[%c54] : memref<88xf32, #tpu.memory_space<smem>>
    %230 = vector.broadcast %229 : f32 to vector<8x128xf32>
    %231 = arith.mulf %190, %230 : vector<8x128xf32>
    %232 = arith.addf %228, %231 : vector<8x128xf32>
    %c66 = arith.constant 66 : index
    %233 = memref.load %arg1[%c66] : memref<88xf32, #tpu.memory_space<smem>>
    %234 = vector.broadcast %233 : f32 to vector<8x128xf32>
    %235 = arith.addf %232, %234 : vector<8x128xf32>
    %236 = math.tanh %235 : vector<8x128xf32>
    %c55 = arith.constant 55 : index
    %237 = memref.load %arg1[%c55] : memref<88xf32, #tpu.memory_space<smem>>
    %238 = vector.broadcast %237 : f32 to vector<8x128xf32>
    %239 = arith.mulf %50, %238 : vector<8x128xf32>
    %c56 = arith.constant 56 : index
    %240 = memref.load %arg1[%c56] : memref<88xf32, #tpu.memory_space<smem>>
    %241 = vector.broadcast %240 : f32 to vector<8x128xf32>
    %242 = arith.mulf %85, %241 : vector<8x128xf32>
    %243 = arith.addf %239, %242 : vector<8x128xf32>
    %c57 = arith.constant 57 : index
    %244 = memref.load %arg1[%c57] : memref<88xf32, #tpu.memory_space<smem>>
    %245 = vector.broadcast %244 : f32 to vector<8x128xf32>
    %246 = arith.mulf %120, %245 : vector<8x128xf32>
    %247 = arith.addf %243, %246 : vector<8x128xf32>
    %c58 = arith.constant 58 : index
    %248 = memref.load %arg1[%c58] : memref<88xf32, #tpu.memory_space<smem>>
    %249 = vector.broadcast %248 : f32 to vector<8x128xf32>
    %250 = arith.mulf %155, %249 : vector<8x128xf32>
    %251 = arith.addf %247, %250 : vector<8x128xf32>
    %c59 = arith.constant 59 : index
    %252 = memref.load %arg1[%c59] : memref<88xf32, #tpu.memory_space<smem>>
    %253 = vector.broadcast %252 : f32 to vector<8x128xf32>
    %254 = arith.mulf %190, %253 : vector<8x128xf32>
    %255 = arith.addf %251, %254 : vector<8x128xf32>
    %c67 = arith.constant 67 : index
    %256 = memref.load %arg1[%c67] : memref<88xf32, #tpu.memory_space<smem>>
    %257 = vector.broadcast %256 : f32 to vector<8x128xf32>
    %258 = arith.addf %255, %257 : vector<8x128xf32>
    %259 = math.tanh %258 : vector<8x128xf32>
    %c60 = arith.constant 60 : index
    %260 = memref.load %arg1[%c60] : memref<88xf32, #tpu.memory_space<smem>>
    %261 = vector.broadcast %260 : f32 to vector<8x128xf32>
    %262 = arith.mulf %50, %261 : vector<8x128xf32>
    %c61 = arith.constant 61 : index
    %263 = memref.load %arg1[%c61] : memref<88xf32, #tpu.memory_space<smem>>
    %264 = vector.broadcast %263 : f32 to vector<8x128xf32>
    %265 = arith.mulf %85, %264 : vector<8x128xf32>
    %266 = arith.addf %262, %265 : vector<8x128xf32>
    %c62 = arith.constant 62 : index
    %267 = memref.load %arg1[%c62] : memref<88xf32, #tpu.memory_space<smem>>
    %268 = vector.broadcast %267 : f32 to vector<8x128xf32>
    %269 = arith.mulf %120, %268 : vector<8x128xf32>
    %270 = arith.addf %266, %269 : vector<8x128xf32>
    %c63 = arith.constant 63 : index
    %271 = memref.load %arg1[%c63] : memref<88xf32, #tpu.memory_space<smem>>
    %272 = vector.broadcast %271 : f32 to vector<8x128xf32>
    %273 = arith.mulf %155, %272 : vector<8x128xf32>
    %274 = arith.addf %270, %273 : vector<8x128xf32>
    %c64 = arith.constant 64 : index
    %275 = memref.load %arg1[%c64] : memref<88xf32, #tpu.memory_space<smem>>
    %276 = vector.broadcast %275 : f32 to vector<8x128xf32>
    %277 = arith.mulf %190, %276 : vector<8x128xf32>
    %278 = arith.addf %274, %277 : vector<8x128xf32>
    %c68 = arith.constant 68 : index
    %279 = memref.load %arg1[%c68] : memref<88xf32, #tpu.memory_space<smem>>
    %280 = vector.broadcast %279 : f32 to vector<8x128xf32>
    %281 = arith.addf %278, %280 : vector<8x128xf32>
    %282 = math.tanh %281 : vector<8x128xf32>
    %c69 = arith.constant 69 : index
    %283 = memref.load %arg1[%c69] : memref<88xf32, #tpu.memory_space<smem>>
    %284 = vector.broadcast %283 : f32 to vector<8x128xf32>
    %285 = arith.mulf %213, %284 : vector<8x128xf32>
    %c70 = arith.constant 70 : index
    %286 = memref.load %arg1[%c70] : memref<88xf32, #tpu.memory_space<smem>>
    %287 = vector.broadcast %286 : f32 to vector<8x128xf32>
    %288 = arith.mulf %236, %287 : vector<8x128xf32>
    %289 = arith.addf %285, %288 : vector<8x128xf32>
    %c71 = arith.constant 71 : index
    %290 = memref.load %arg1[%c71] : memref<88xf32, #tpu.memory_space<smem>>
    %291 = vector.broadcast %290 : f32 to vector<8x128xf32>
    %292 = arith.mulf %259, %291 : vector<8x128xf32>
    %293 = arith.addf %289, %292 : vector<8x128xf32>
    %c72 = arith.constant 72 : index
    %294 = memref.load %arg1[%c72] : memref<88xf32, #tpu.memory_space<smem>>
    %295 = vector.broadcast %294 : f32 to vector<8x128xf32>
    %296 = arith.mulf %282, %295 : vector<8x128xf32>
    %297 = arith.addf %293, %296 : vector<8x128xf32>
    %c81 = arith.constant 81 : index
    %298 = memref.load %arg1[%c81] : memref<88xf32, #tpu.memory_space<smem>>
    %299 = vector.broadcast %298 : f32 to vector<8x128xf32>
    %300 = arith.addf %297, %299 : vector<8x128xf32>
    %301 = math.tanh %300 : vector<8x128xf32>
    %c73 = arith.constant 73 : index
    %302 = memref.load %arg1[%c73] : memref<88xf32, #tpu.memory_space<smem>>
    %303 = vector.broadcast %302 : f32 to vector<8x128xf32>
    %304 = arith.mulf %213, %303 : vector<8x128xf32>
    %c74 = arith.constant 74 : index
    %305 = memref.load %arg1[%c74] : memref<88xf32, #tpu.memory_space<smem>>
    %306 = vector.broadcast %305 : f32 to vector<8x128xf32>
    %307 = arith.mulf %236, %306 : vector<8x128xf32>
    %308 = arith.addf %304, %307 : vector<8x128xf32>
    %c75 = arith.constant 75 : index
    %309 = memref.load %arg1[%c75] : memref<88xf32, #tpu.memory_space<smem>>
    %310 = vector.broadcast %309 : f32 to vector<8x128xf32>
    %311 = arith.mulf %259, %310 : vector<8x128xf32>
    %312 = arith.addf %308, %311 : vector<8x128xf32>
    %c76 = arith.constant 76 : index
    %313 = memref.load %arg1[%c76] : memref<88xf32, #tpu.memory_space<smem>>
    %314 = vector.broadcast %313 : f32 to vector<8x128xf32>
    %315 = arith.mulf %282, %314 : vector<8x128xf32>
    %316 = arith.addf %312, %315 : vector<8x128xf32>
    %c82 = arith.constant 82 : index
    %317 = memref.load %arg1[%c82] : memref<88xf32, #tpu.memory_space<smem>>
    %318 = vector.broadcast %317 : f32 to vector<8x128xf32>
    %319 = arith.addf %316, %318 : vector<8x128xf32>
    %320 = math.tanh %319 : vector<8x128xf32>
    %c77 = arith.constant 77 : index
    %321 = memref.load %arg1[%c77] : memref<88xf32, #tpu.memory_space<smem>>
    %322 = vector.broadcast %321 : f32 to vector<8x128xf32>
    %323 = arith.mulf %213, %322 : vector<8x128xf32>
    %c78 = arith.constant 78 : index
    %324 = memref.load %arg1[%c78] : memref<88xf32, #tpu.memory_space<smem>>
    %325 = vector.broadcast %324 : f32 to vector<8x128xf32>
    %326 = arith.mulf %236, %325 : vector<8x128xf32>
    %327 = arith.addf %323, %326 : vector<8x128xf32>
    %c79 = arith.constant 79 : index
    %328 = memref.load %arg1[%c79] : memref<88xf32, #tpu.memory_space<smem>>
    %329 = vector.broadcast %328 : f32 to vector<8x128xf32>
    %330 = arith.mulf %259, %329 : vector<8x128xf32>
    %331 = arith.addf %327, %330 : vector<8x128xf32>
    %c80 = arith.constant 80 : index
    %332 = memref.load %arg1[%c80] : memref<88xf32, #tpu.memory_space<smem>>
    %333 = vector.broadcast %332 : f32 to vector<8x128xf32>
    %334 = arith.mulf %282, %333 : vector<8x128xf32>
    %335 = arith.addf %331, %334 : vector<8x128xf32>
    %c83 = arith.constant 83 : index
    %336 = memref.load %arg1[%c83] : memref<88xf32, #tpu.memory_space<smem>>
    %337 = vector.broadcast %336 : f32 to vector<8x128xf32>
    %338 = arith.addf %335, %337 : vector<8x128xf32>
    %339 = math.tanh %338 : vector<8x128xf32>
    %c84 = arith.constant 84 : index
    %340 = memref.load %arg1[%c84] : memref<88xf32, #tpu.memory_space<smem>>
    %341 = vector.broadcast %340 : f32 to vector<8x128xf32>
    %342 = arith.mulf %301, %341 : vector<8x128xf32>
    %c85 = arith.constant 85 : index
    %343 = memref.load %arg1[%c85] : memref<88xf32, #tpu.memory_space<smem>>
    %344 = vector.broadcast %343 : f32 to vector<8x128xf32>
    %345 = arith.mulf %320, %344 : vector<8x128xf32>
    %346 = arith.addf %342, %345 : vector<8x128xf32>
    %c86 = arith.constant 86 : index
    %347 = memref.load %arg1[%c86] : memref<88xf32, #tpu.memory_space<smem>>
    %348 = vector.broadcast %347 : f32 to vector<8x128xf32>
    %349 = arith.mulf %339, %348 : vector<8x128xf32>
    %350 = arith.addf %346, %349 : vector<8x128xf32>
    %c87 = arith.constant 87 : index
    %351 = memref.load %arg1[%c87] : memref<88xf32, #tpu.memory_space<smem>>
    %352 = vector.broadcast %351 : f32 to vector<8x128xf32>
    %353 = arith.addf %350, %352 : vector<8x128xf32>
    %354 = arith.negf %353 : vector<8x128xf32>
    %355 = math.exp %354 : vector<8x128xf32>
    %cst = arith.constant 1.000000e+00 : f32
    %356 = vector.broadcast %cst : f32 to vector<8x128xf32>
    %357 = arith.addf %356, %355 : vector<8x128xf32>
    %358 = arith.divf %356, %357 : vector<8x128xf32>
    %c0_24 = arith.constant 0 : index
    %c0_25 = arith.constant 0 : index
    %359 = vector.load %arg3[%c0_24, %c0_25] : memref<8x128xf32, #tpu.memory_space<vmem>>, vector<8x128xf32>
    tpu.vector_store %arg3[%c0_24, %c0_25], %358 {strides = array<i32>} : memref<8x128xf32, #tpu.memory_space<vmem>>, vector<8x128xf32>,
    return
  }
  func.func @transform_0(%arg0: i32) -> i32 {
    %c0_i32 = arith.constant 0 : i32
    %c0_i32_0 = arith.constant 0 : i32
    return %c0_i32 : i32
  }
  func.func @transform_1(%arg0: i32) -> (i32, i32, i32) {
    %c0_i32 = arith.constant 0 : i32
    %c0_i32_0 = arith.constant 0 : i32
    %c0_i32_1 = arith.constant 0 : i32
    return %c0_i32, %arg0, %c0_i32_0 : i32, i32, i32
  }
  func.func @transform_2(%arg0: i32) -> (i32, i32) {
    %c0_i32 = arith.constant 0 : i32
    %c0_i32_0 = arith.constant 0 : i32
    return %arg0, %c0_i32 : i32, i32
  }
}

</mosaic_0001>

<llo_original>
// kernel: tpu_custom_call.1
$region0: #{tpu_custom_call.1}
  #allocation0 [shape = 'u32[]', space=smem, size = 0x4, offset = 0x4, fixed_abs, tag = 'smem constant byte address 0x4 - core index']
  #allocation1 [shape = 'u32[144,128]{1,0:T(1,128)}', space=vmem, size = 0x12000, scoped, tag = 'internal scratch']
  %s0 = inlined_call_operand.hbm [shape: f32[88], index: 0, kind: input, shape index: {}]
  %s1 = inlined_call_operand.hbm [shape: f32[8,8,128], index: 1, kind: input, shape index: {}]
  %s2 = inlined_call_operand.hbm [shape: f32[8,128], index: 2, kind: output, shape index: {}]
  %s3 = sld [smem:[#allocation0]]
  $region26: #{tpu_custom_call.1} parent=0
    _
  %s5 = ssub.s32 1, %s3
  %s6 = scalar_select 0, %s5, %s3
  $region1: #{tpu_custom_call.1} parent=0
    #allocation2 [shape = 'u8[512]{0}', space=smem, size = 0x200, scoped, tag = 'input window, operand 0, single buffered']
    #allocation3 [shape = 's32[1]{0}', space=sflag, size = 0x4, scoped, tag = 'scoped memory for tpu_custom_call.1']
    #allocation4 [shape = 's32[1]{0}', space=sflag, size = 0x4, scoped, tag = 'scoped memory for tpu_custom_call.1']
    #allocation5 [shape = 's32[1]{0}', space=sflag, size = 0x4, scoped, tag = 'scoped memory for tpu_custom_call.1']
    #allocation6 [shape = 'u8[32768]{0}', space=vmem, size = 0x8000, scoped, tag = 'input window, operand 1, single buffered']
    #allocation7 [shape = 'u8[4096]{0}', space=vmem, size = 0x1000, scoped, tag = 'output window, operand 0, single buffered']
    %7 = vsyncpa [#allocation5], 0
    %8 = vsyncpa [#allocation3], 0
    %9 = vsyncpa [#allocation4], 0
    // Predicated region
    $region2: #{tpu_custom_call.1} parent=1 // pred_check
      _
    $region3: #{tpu_custom_call.1} parent=1 // pred_check_branch
      %11 = sbr.rel (0) target = $region5
    $region4: #{tpu_custom_call.1} parent=1 // pred_region
      %s13 = ssub.s32 16, 16
      %14 = vsyncadd [#allocation5], %s13
      %17 = dma.hbm_to_smem %s0, 16, [#allocation2], [#allocation5]
    $region5: #{tpu_custom_call.1} parent=1 // pred_fallthru
      _
    // Predicated region
    $region6: #{tpu_custom_call.1} parent=1 // pred_check
      _
    $region7: #{tpu_custom_call.1} parent=1 // pred_check_branch
      %19 = sbr.rel (0) target = $region9
    $region8: #{tpu_custom_call.1} parent=1 // pred_region
      %s21 = ssub.s32 1024, 1024
      %22 = vsyncadd [#allocation3], %s21
      %s23 = sshll.u32 [#allocation6], 4
      %s24 = int_to_ptr.vmem [resolvable:$true] %s23
      %29 = dma.hbm_to_vmem [thread:$0]  %s1, 1024, %s24, [#allocation3], 128, 128, 8
    $region9: #{tpu_custom_call.1} parent=1 // pred_fallthru
      _
    // Predicated region
    $region10: #{tpu_custom_call.1} parent=1 // pred_check
      _
    $region11: #{tpu_custom_call.1} parent=1 // pred_check_branch
      %31 = sbr.rel (0) target = $region13
    $region12: #{tpu_custom_call.1} parent=1 // pred_region
      %32 = dma.done [#allocation5], 16
    $region13: #{tpu_custom_call.1} parent=1 // pred_fallthru
      _
    // Predicated region
    $region14: #{tpu_custom_call.1} parent=1 // pred_check
      _
    $region15: #{tpu_custom_call.1} parent=1 // pred_check_branch
      %34 = sbr.rel (0) target = $region17
    $region16: #{tpu_custom_call.1} parent=1 // pred_region
      %35 = dma.done [#allocation3], 1024
    $region17: #{tpu_custom_call.1} parent=1 // pred_fallthru
      _
    %36 = sfence
    %v37 = vld [vmem:[#allocation6] sm:$0xff]
    %s38 = scalar_lea.vmem [#allocation6], 8
    %v39 = vld [vmem:[%s38] sm:$0xff]
    %s40 = scalar_lea.vmem [#allocation6], 16
    %v41 = vld [vmem:[%s40] sm:$0xff]
    %s42 = scalar_lea.vmem [#allocation6], 24
    %v43 = vld [vmem:[%s42] sm:$0xff]
    %s44 = scalar_lea.vmem [#allocation6], 32
    %v45 = vld [vmem:[%s44] sm:$0xff]
    %s46 = scalar_lea.vmem [#allocation6], 40
    %v47 = vld [vmem:[%s46] sm:$0xff]
    %s48 = scalar_lea.vmem [#allocation6], 48
    %v49 = vld [vmem:[%s48] sm:$0xff]
    %s50 = scalar_lea.vmem [#allocation6], 56
    %v51 = vld [vmem:[%s50] sm:$0xff]
    %s52 = sld [smem:[#allocation2]]
    %v53 = vstv %s52
    %v54 = vmul.f32 %v37, %v53
    %s55 = sld [smem:[#allocation2 + $0x1]]
    %v56 = vstv %s55
    %v57 = vmul.f32 %v39, %v56
    %v58 = vadd.f32 %v54, %v57
    %s59 = sld [smem:[#allocation2 + $0x2]]
    %v60 = vstv %s59
    %v61 = vmul.f32 %v41, %v60
    %v62 = vadd.f32 %v58, %v61
    %s63 = sld [smem:[#allocation2 + $0x3]]
    %v64 = vstv %s63
    %v65 = vmul.f32 %v43, %v64
    %v66 = vadd.f32 %v62, %v65
    %s67 = sld [smem:[#allocation2 + $0x4]]
    %v68 = vstv %s67
    %v69 = vmul.f32 %v45, %v68
    %v70 = vadd.f32 %v66, %v69
    %s71 = sld [smem:[#allocation2 + $0x5]]
    %v72 = vstv %s71
    %v73 = vmul.f32 %v47, %v72
    %v74 = vadd.f32 %v70, %v73
    %s75 = sld [smem:[#allocation2 + $0x6]]
    %v76 = vstv %s75
    %v77 = vmul.f32 %v49, %v76
    %v78 = vadd.f32 %v74, %v77
    %s79 = sld [smem:[#allocation2 + $0x7]]
    %v80 = vstv %s79
    %v81 = vmul.f32 %v51, %v80
    %v82 = vadd.f32 %v78, %v81
    %s83 = sld [smem:[#allocation2 + $0x28]]
    %v84 = vstv %s83
    %v85 = vadd.f32 %v82, %v84
    %v86 = vtanh.pop %v85
    %s87 = sld [smem:[#allocation2 + $0x8]]
    %v88 = vstv %s87
    %v89 = vmul.f32 %v37, %v88
    %s90 = sld [smem:[#allocation2 + $0x9]]
    %v91 = vstv %s90
    %v92 = vmul.f32 %v39, %v91
    %v93 = vadd.f32 %v89, %v92
    %s94 = sld [smem:[#allocation2 + $0xa]]
    %v95 = vstv %s94
    %v96 = vmul.f32 %v41, %v95
    %v97 = vadd.f32 %v93, %v96
    %s98 = sld [smem:[#allocation2 + $0xb]]
    %v99 = vstv %s98
    %v100 = vmul.f32 %v43, %v99
    %v101 = vadd.f32 %v97, %v100
    %s102 = sld [smem:[#allocation2 + $0xc]]
    %v103 = vstv %s102
    %v104 = vmul.f32 %v45, %v103
    %v105 = vadd.f32 %v101, %v104
    %s106 = sld [smem:[#allocation2 + $0xd]]
    %v107 = vstv %s106
    %v108 = vmul.f32 %v47, %v107
    %v109 = vadd.f32 %v105, %v108
    %s110 = sld [smem:[#allocation2 + $0xe]]
    %v111 = vstv %s110
    %v112 = vmul.f32 %v49, %v111
    %v113 = vadd.f32 %v109, %v112
    %s114 = sld [smem:[#allocation2 + $0xf]]
    %v115 = vstv %s114
    %v116 = vmul.f32 %v51, %v115
    %v117 = vadd.f32 %v113, %v116
    %s118 = sld [smem:[#allocation2 + $0x29]]
    %v119 = vstv %s118
    %v120 = vadd.f32 %v117, %v119
    %v121 = vtanh.pop %v120
    %s122 = sld [smem:[#allocation2 + $0x10]]
    %v123 = vstv %s122
    %v124 = vmul.f32 %v37, %v123
    %s125 = sld [smem:[#allocation2 + $0x11]]
    %v126 = vstv %s125
    %v127 = vmul.f32 %v39, %v126
    %v128 = vadd.f32 %v124, %v127
    %s129 = sld [smem:[#allocation2 + $0x12]]
    %v130 = vstv %s129
    %v131 = vmul.f32 %v41, %v130
    %v132 = vadd.f32 %v128, %v131
    %s133 = sld [smem:[#allocation2 + $0x13]]
    %v134 = vstv %s133
    %v135 = vmul.f32 %v43, %v134
    %v136 = vadd.f32 %v132, %v135
    %s137 = sld [smem:[#allocation2 + $0x14]]
    %v138 = vstv %s137
    %v139 = vmul.f32 %v45, %v138
    %v140 = vadd.f32 %v136, %v139
    %s141 = sld [smem:[#allocation2 + $0x15]]
    %v142 = vstv %s141
    %v143 = vmul.f32 %v47, %v142
    %v144 = vadd.f32 %v140, %v143
    %s145 = sld [smem:[#allocation2 + $0x16]]
    %v146 = vstv %s145
    %v147 = vmul.f32 %v49, %v146
    %v148 = vadd.f32 %v144, %v147
    %s149 = sld [smem:[#allocation2 + $0x17]]
    %v150 = vstv %s149
    %v151 = vmul.f32 %v51, %v150
    %v152 = vadd.f32 %v148, %v151
    %s153 = sld [smem:[#allocation2 + $0x2a]]
    %v154 = vstv %s153
    %v155 = vadd.f32 %v152, %v154
    %v156 = vtanh.pop %v155
    %s157 = sld [smem:[#allocation2 + $0x18]]
    %v158 = vstv %s157
    %v159 = vmul.f32 %v37, %v158
    %s160 = sld [smem:[#allocation2 + $0x19]]
    %v161 = vstv %s160
    %v162 = vmul.f32 %v39, %v161
    %v163 = vadd.f32 %v159, %v162
    %s164 = sld [smem:[#allocation2 + $0x1a]]
    %v165 = vstv %s164
    %v166 = vmul.f32 %v41, %v165
    %v167 = vadd.f32 %v163, %v166
    %s168 = sld [smem:[#allocation2 + $0x1b]]
    %v169 = vstv %s168
    %v170 = vmul.f32 %v43, %v169
    %v171 = vadd.f32 %v167, %v170
    %s172 = sld [smem:[#allocation2 + $0x1c]]
    %v173 = vstv %s172
    %v174 = vmul.f32 %v45, %v173
    %v175 = vadd.f32 %v171, %v174
    %s176 = sld [smem:[#allocation2 + $0x1d]]
    %v177 = vstv %s176
    %v178 = vmul.f32 %v47, %v177
    %v179 = vadd.f32 %v175, %v178
    %s180 = sld [smem:[#allocation2 + $0x1e]]
    %v181 = vstv %s180
    %v182 = vmul.f32 %v49, %v181
    %v183 = vadd.f32 %v179, %v182
    %s184 = sld [smem:[#allocation2 + $0x1f]]
    %v185 = vstv %s184
    %v186 = vmul.f32 %v51, %v185
    %v187 = vadd.f32 %v183, %v186
    %s188 = sld [smem:[#allocation2 + $0x2b]]
    %v189 = vstv %s188
    %v190 = vadd.f32 %v187, %v189
    %v191 = vtanh.pop %v190
    %s192 = sld [smem:[#allocation2 + $0x20]]
    %v193 = vstv %s192
    %v194 = vmul.f32 %v37, %v193
    %s195 = sld [smem:[#allocation2 + $0x21]]
    %v196 = vstv %s195
    %v197 = vmul.f32 %v39, %v196
    %v198 = vadd.f32 %v194, %v197
    %s199 = sld [smem:[#allocation2 + $0x22]]
    %v200 = vstv %s199
    %v201 = vmul.f32 %v41, %v200
    %v202 = vadd.f32 %v198, %v201
    %s203 = sld [smem:[#allocation2 + $0x23]]
    %v204 = vstv %s203
    %v205 = vmul.f32 %v43, %v204
    %v206 = vadd.f32 %v202, %v205
    %s207 = sld [smem:[#allocation2 + $0x24]]
    %v208 = vstv %s207
    %v209 = vmul.f32 %v45, %v208
    %v210 = vadd.f32 %v206, %v209
    %s211 = sld [smem:[#allocation2 + $0x25]]
    %v212 = vstv %s211
    %v213 = vmul.f32 %v47, %v212
    %v214 = vadd.f32 %v210, %v213
    %s215 = sld [smem:[#allocation2 + $0x26]]
    %v216 = vstv %s215
    %v217 = vmul.f32 %v49, %v216
    %v218 = vadd.f32 %v214, %v217
    %s219 = sld [smem:[#allocation2 + $0x27]]
    %v220 = vstv %s219
    %v221 = vmul.f32 %v51, %v220
    %v222 = vadd.f32 %v218, %v221
    %s223 = sld [smem:[#allocation2 + $0x2c]]
    %v224 = vstv %s223
    %v225 = vadd.f32 %v222, %v224
    %v226 = vtanh.pop %v225
    %s227 = sld [smem:[#allocation2 + $0x2d]]
    %v228 = vstv %s227
    %v229 = vmul.f32 %v86, %v228
    %s230 = sld [smem:[#allocation2 + $0x2e]]
    %v231 = vstv %s230
    %v232 = vmul.f32 %v121, %v231
    %v233 = vadd.f32 %v229, %v232
    %s234 = sld [smem:[#allocation2 + $0x2f]]
    %v235 = vstv %s234
    %v236 = vmul.f32 %v156, %v235
    %v237 = vadd.f32 %v233, %v236
    %s238 = sld [smem:[#allocation2 + $0x30]]
    %v239 = vstv %s238
    %v240 = vmul.f32 %v191, %v239
    %v241 = vadd.f32 %v237, %v240
    %s242 = sld [smem:[#allocation2 + $0x31]]
    %v243 = vstv %s242
    %v244 = vmul.f32 %v226, %v243
    %v245 = vadd.f32 %v241, %v244
    %s246 = sld [smem:[#allocation2 + $0x41]]
    %v247 = vstv %s246
    %v248 = vadd.f32 %v245, %v247
    %v249 = vtanh.pop %v248
    %s250 = sld [smem:[#allocation2 + $0x32]]
    %v251 = vstv %s250
    %v252 = vmul.f32 %v86, %v251
    %s253 = sld [smem:[#allocation2 + $0x33]]
    %v254 = vstv %s253
    %v255 = vmul.f32 %v121, %v254
    %v256 = vadd.f32 %v252, %v255
    %s257 = sld [smem:[#allocation2 + $0x34]]
    %v258 = vstv %s257
    %v259 = vmul.f32 %v156, %v258
    %v260 = vadd.f32 %v256, %v259
    %s261 = sld [smem:[#allocation2 + $0x35]]
    %v262 = vstv %s261
    %v263 = vmul.f32 %v191, %v262
    %v264 = vadd.f32 %v260, %v263
    %s265 = sld [smem:[#allocation2 + $0x36]]
    %v266 = vstv %s265
    %v267 = vmul.f32 %v226, %v266
    %v268 = vadd.f32 %v264, %v267
    %s269 = sld [smem:[#allocation2 + $0x42]]
    %v270 = vstv %s269
    %v271 = vadd.f32 %v268, %v270
    %v272 = vtanh.pop %v271
    %s273 = sld [smem:[#allocation2 + $0x37]]
    %v274 = vstv %s273
    %v275 = vmul.f32 %v86, %v274
    %s276 = sld [smem:[#allocation2 + $0x38]]
    %v277 = vstv %s276
    %v278 = vmul.f32 %v121, %v277
    %v279 = vadd.f32 %v275, %v278
    %s280 = sld [smem:[#allocation2 + $0x39]]
    %v281 = vstv %s280
    %v282 = vmul.f32 %v156, %v281
    %v283 = vadd.f32 %v279, %v282
    %s284 = sld [smem:[#allocation2 + $0x3a]]
    %v285 = vstv %s284
    %v286 = vmul.f32 %v191, %v285
    %v287 = vadd.f32 %v283, %v286
    %s288 = sld [smem:[#allocation2 + $0x3b]]
    %v289 = vstv %s288
    %v290 = vmul.f32 %v226, %v289
    %v291 = vadd.f32 %v287, %v290
    %s292 = sld [smem:[#allocation2 + $0x43]]
    %v293 = vstv %s292
    %v294 = vadd.f32 %v291, %v293
    %v295 = vtanh.pop %v294
    %s296 = sld [smem:[#allocation2 + $0x3c]]
    %v297 = vstv %s296
    %v298 = vmul.f32 %v86, %v297
    %s299 = sld [smem:[#allocation2 + $0x3d]]
    %v300 = vstv %s299
    %v301 = vmul.f32 %v121, %v300
    %v302 = vadd.f32 %v298, %v301
    %s303 = sld [smem:[#allocation2 + $0x3e]]
    %v304 = vstv %s303
    %v305 = vmul.f32 %v156, %v304
    %v306 = vadd.f32 %v302, %v305
    %s307 = sld [smem:[#allocation2 + $0x3f]]
    %v308 = vstv %s307
    %v309 = vmul.f32 %v191, %v308
    %v310 = vadd.f32 %v306, %v309
    %s311 = sld [smem:[#allocation2 + $0x40]]
    %v312 = vstv %s311
    %v313 = vmul.f32 %v226, %v312
    %v314 = vadd.f32 %v310, %v313
    %s315 = sld [smem:[#allocation2 + $0x44]]
    %v316 = vstv %s315
    %v317 = vadd.f32 %v314, %v316
    %v318 = vtanh.pop %v317
    %s319 = sld [smem:[#allocation2 + $0x45]]
    %v320 = vstv %s319
    %v321 = vmul.f32 %v249, %v320
    %s322 = sld [smem:[#allocation2 + $0x46]]
    %v323 = vstv %s322
    %v324 = vmul.f32 %v272, %v323
    %v325 = vadd.f32 %v321, %v324
    %s326 = sld [smem:[#allocation2 + $0x47]]
    %v327 = vstv %s326
    %v328 = vmul.f32 %v295, %v327
    %v329 = vadd.f32 %v325, %v328
    %s330 = sld [smem:[#allocation2 + $0x48]]
    %v331 = vstv %s330
    %v332 = vmul.f32 %v318, %v331
    %v333 = vadd.f32 %v329, %v332
    %s334 = sld [smem:[#allocation2 + $0x51]]
    %v335 = vstv %s334
    %v336 = vadd.f32 %v333, %v335
    %v337 = vtanh.pop %v336
    %s338 = sld [smem:[#allocation2 + $0x49]]
    %v339 = vstv %s338
    %v340 = vmul.f32 %v249, %v339
    %s341 = sld [smem:[#allocation2 + $0x4a]]
    %v342 = vstv %s341
    %v343 = vmul.f32 %v272, %v342
    %v344 = vadd.f32 %v340, %v343
    %s345 = sld [smem:[#allocation2 + $0x4b]]
    %v346 = vstv %s345
    %v347 = vmul.f32 %v295, %v346
    %v348 = vadd.f32 %v344, %v347
    %s349 = sld [smem:[#allocation2 + $0x4c]]
    %v350 = vstv %s349
    %v351 = vmul.f32 %v318, %v350
    %v352 = vadd.f32 %v348, %v351
    %s353 = sld [smem:[#allocation2 + $0x52]]
    %v354 = vstv %s353
    %v355 = vadd.f32 %v352, %v354
    %v356 = vtanh.pop %v355
    %s357 = sld [smem:[#allocation2 + $0x4d]]
    %v358 = vstv %s357
    %v359 = vmul.f32 %v249, %v358
    %s360 = sld [smem:[#allocation2 + $0x4e]]
    %v361 = vstv %s360
    %v362 = vmul.f32 %v272, %v361
    %v363 = vadd.f32 %v359, %v362
    %s364 = sld [smem:[#allocation2 + $0x4f]]
    %v365 = vstv %s364
    %v366 = vmul.f32 %v295, %v365
    %v367 = vadd.f32 %v363, %v366
    %s368 = sld [smem:[#allocation2 + $0x50]]
    %v369 = vstv %s368
    %v370 = vmul.f32 %v318, %v369
    %v371 = vadd.f32 %v367, %v370
    %s372 = sld [smem:[#allocation2 + $0x53]]
    %v373 = vstv %s372
    %v374 = vadd.f32 %v371, %v373
    %v375 = vtanh.pop %v374
    %s376 = sld [smem:[#allocation2 + $0x54]]
    %v377 = vstv %s376
    %v378 = vmul.f32 %v337, %v377
    %s379 = sld [smem:[#allocation2 + $0x55]]
    %v380 = vstv %s379
    %v381 = vmul.f32 %v356, %v380
    %v382 = vadd.f32 %v378, %v381
    %s383 = sld [smem:[#allocation2 + $0x56]]
    %v384 = vstv %s383
    %v385 = vmul.f32 %v375, %v384
    %v386 = vadd.f32 %v382, %v385
    %s387 = sld [smem:[#allocation2 + $0x57]]
    %v388 = vstv %s387
    %v389 = vadd.f32 %v386, %v388
    %v390 = vxor.u32 %v389, 2147483648
    %v391 = vmul.f32 %v390, 1.442695
    %v392 = vpow.pop %v391
    %v393 = vadd.f32 %v392, 1.0
    %v394 = vrcp.pop %v393
    %v395 = vmul.f32 1.0, %v394
    %396 = vst [vmem:[#allocation7] sm:$0xff] %v395
    // Predicated region
    $region18: #{tpu_custom_call.1} parent=1 // pred_check
      _
    $region19: #{tpu_custom_call.1} parent=1 // pred_check_branch
      %398 = sbr.rel (0) target = $region21
    $region20: #{tpu_custom_call.1} parent=1 // pred_region
      %s400 = ssub.s32 128, 128
      %401 = vsyncadd [#allocation4], %s400
      %s403 = sshll.u32 [#allocation7], 4
      %s404 = int_to_ptr.vmem [resolvable:$true] %s403
      %406 = dma.vmem_to_hbm [thread:$0]  %s404, 128, %s2, [#allocation4]
    $region21: #{tpu_custom_call.1} parent=1 // pred_fallthru
      _
    // Predicated region
    $region22: #{tpu_custom_call.1} parent=1 // pred_check
      _
    $region23: #{tpu_custom_call.1} parent=1 // pred_check_branch
      %408 = sbr.rel (0) target = $region25
    $region24: #{tpu_custom_call.1} parent=1 // pred_region
      %409 = dma.done [#allocation4], 128
    $region25: #{tpu_custom_call.1} parent=1 // pred_fallthru
      _
    %410 = vsyncpa [#allocation3], 1
    %411 = vsyncpa [#allocation4], 1
    %412 = vsyncpa [#allocation5], 1

</llo_original>
